<compile_context>
chip_gen: v7x
topology: tpu7x:2x2x1
jax: 0.10.0
libtpu: 0.0.40
codegen_flags: <defaults>
</compile_context>

<pallas_src>
import math

import jax
import jax.numpy as jnp
from jax.experimental import pallas as pl
from jax.experimental.pallas import tpu as pltpu

POSE_DIM = 3 + 6  # QFunction input layout: obs ++ pose(3+6) ++ action


def _qfunction_kernel(obs_ref, pose_ref, act_ref,
                      w1o_ref, w1p_ref, w1a_ref, b1_ref,
                      w2_ref, b2_ref, w3_ref, b3_ref,
                      out_ref):
    """Fused QFunction trunk on one batch tile (concat fused via split-W1 dots)."""
    cd = jnp.bfloat16  # MXU input dtype; accumulation stays f32 via preferred_element_type.

    # Layer 1: implicit concat -> split matmuls, f32 accumulate, bias, ReLU.
    h1 = (
        jnp.dot(obs_ref[...].astype(cd), w1o_ref[...].astype(cd),
                preferred_element_type=jnp.float32)
        + jnp.dot(pose_ref[...].astype(cd), w1p_ref[...].astype(cd),
                  preferred_element_type=jnp.float32)
        + jnp.dot(act_ref[...].astype(cd), w1a_ref[...].astype(cd),
                  preferred_element_type=jnp.float32)
        + b1_ref[...]
    )
    h1 = jnp.maximum(h1, 0.0)

    # Layer 2: (TB, H) @ (H, H) on the MXU.
    h2 = jnp.dot(h1.astype(cd), w2_ref[...].astype(cd),
                 preferred_element_type=jnp.float32) + b2_ref[...]
    h2 = jnp.maximum(h2, 0.0)

    # Layer 3 (H -> 1): VPU multiply + XLU lane reduction (avoids an N=1 MXU pass).
    q = jnp.sum(h2 * w3_ref[...], axis=-1, keepdims=True) + b3_ref[...]
    out_ref[...] = q.astype(out_ref.dtype)


def _round_up(x, m):
    return ((x + m - 1) // m) * m


def qfunction_forward(obs, pose, action, params):
    """QFunction forward: (implicit concat) + 3-layer MLP, fully fused in one pallas_call."""
    assert obs.shape[0] == pose.shape[0] == action.shape[0]
    assert pose.shape[1] == POSE_DIM
    B = obs.shape[0]
    obs_dim = obs.shape[1]
    act_dim = action.shape[1]

    w1o, w1p, w1a = params["w1_obs"], params["w1_pose"], params["w1_act"]
    b1, w2, b2, w3, b3 = (params[k] for k in ("b1", "w2", "b2", "w3", "b3"))
    H = w2.shape[0]

    # Batch tile: multiple of 8 (sublane rule); cap at 512 rows, which keeps the
    # double-buffered activation tiles + resident weights well inside the scoped
    # VMEM default even on v7x (64 MiB physical / 32 MiB scoped).
    TB = min(512, _round_up(B, 8))
    padded_B = _round_up(B, TB)
    if padded_B != B:
        pad = ((0, padded_B - B), (0, 0))
        obs = jnp.pad(obs, pad)
        pose = jnp.pad(pose, pad)
        action = jnp.pad(action, pad)
    grid = (padded_B // TB,)

    def row_spec(n):
        # Batch-tiled activation stream.
        return pl.BlockSpec((TB, n), lambda i: (i, 0))

    def const_spec(a):
        # Full-array block; block index never changes -> stays resident in VMEM
        # across grid steps (Pallas skips the repeat DMA).
        return pl.BlockSpec(a.shape, lambda i: (0,) * a.ndim)

    in_dim = obs_dim + POSE_DIM + act_dim
    n_weight_elems = in_dim * H + H + H * H + H + H + 1
    cost = pl.CostEstimate(
        flops=2 * B * (in_dim * H + H * H + H),
        transcendentals=0,
        bytes_accessed=4 * (B * (in_dim + 1) + n_weight_elems),
    )

    out = pl.pallas_call(
        _qfunction_kernel,
        out_shape=jax.ShapeDtypeStruct((padded_B, 1), jnp.float32),
        grid=grid,
        in_specs=[
            row_spec(obs_dim), row_spec(POSE_DIM), row_spec(act_dim),
            const_spec(w1o), const_spec(w1p), const_spec(w1a), const_spec(b1),
            const_spec(w2), const_spec(b2), const_spec(w3), const_spec(b3),
        ],
        out_specs=pl.BlockSpec((TB, 1), lambda i: (i, 0)),
        compiler_params=pltpu.CompilerParams(dimension_semantics=("parallel",)),
        cost_estimate=cost,
    )(obs, pose, action, w1o, w1p, w1a, b1, w2, b2, w3, b3)

    return out[:B] if padded_B != B else out


def init_qfunction_params(key, obs_dim, action_dim, hidden_dim):
    """PyTorch-Linear-style uniform init; weights stored as (in, out); W1 pre-split."""
    in_dim = obs_dim + POSE_DIM + action_dim

    def uniform(k, shape, fan_in):
        bound = 1.0 / math.sqrt(float(fan_in))
        return jax.random.uniform(k, shape, jnp.float32, -bound, bound)

    _, k1w, k1b, k2w, k2b, k3w, k3b = jax.random.split(key, 7)
    w1 = uniform(k1w, (in_dim, hidden_dim), in_dim)
    return {
        # W1 split along its input rows so the concat fuses into the kernel.
        "w1_obs": w1[:obs_dim],
        "w1_pose": w1[obs_dim:obs_dim + POSE_DIM],
        "w1_act": w1[obs_dim + POSE_DIM:],
        "b1": uniform(k1b, (1, hidden_dim), in_dim),
        "w2": uniform(k2w, (hidden_dim, hidden_dim), hidden_dim),
        "b2": uniform(k2b, (1, hidden_dim), hidden_dim),
        # Final layer weight stored as a (1, hidden) row for the VPU/XLU reduction.
        "w3": uniform(k3w, (1, hidden_dim), hidden_dim),
        "b3": uniform(k3b, (1, 1), hidden_dim),
    }


if __name__ == "__main__":
    key = jax.random.PRNGKey(0)

    # Small shapes consistent with the module; batch=10 also exercises the
    # pad-to-multiple-of-8 path.
    batch = 10
    obs_dim = 32
    action_dim = 6
    hidden_dim = 64

    k_obs, k_pose, k_act, k_params = jax.random.split(key, 4)
    obs = jax.random.normal(k_obs, (batch, obs_dim), jnp.float32)
    pose = jax.random.normal(k_pose, (batch, POSE_DIM), jnp.float32)
    action = jax.random.normal(k_act, (batch, action_dim), jnp.float32)

    params = init_qfunction_params(k_params, obs_dim, action_dim, hidden_dim)

    q = jax.jit(qfunction_forward)(obs, pose, action, params)
    q = jax.block_until_ready(q)

    # Plain-JAX f32 reference (same math as the PyTorch trunk). The kernel uses
    # bf16 MXU inputs with f32 accumulation, so compare with a relaxed tolerance.
    x = jnp.concatenate([obs, pose, action], axis=1)
    w1_full = jnp.concatenate(
        [params["w1_obs"], params["w1_pose"], params["w1_act"]], axis=0)
    h1 = jnp.maximum(x @ w1_full + params["b1"], 0.0)
    h2 = jnp.maximum(h1 @ params["w2"] + params["b2"], 0.0)
    ref = h2 @ params["w3"].T + params["b3"]

    assert q.shape == (batch, 1)
    assert jnp.allclose(q, ref, atol=5e-2, rtol=5e-2), (q, ref)

    print("KERNEL_OK")
</pallas_src>

<mosaic_0001>
module attributes {stable_mosaic.version = 11 : i64} {
  func.func @_qfunction_kernel(%arg0: i32, %arg1: memref<16x32xf32, #tpu.memory_space<vmem>>, %arg2: memref<16x9xf32, #tpu.memory_space<vmem>>, %arg3: memref<16x6xf32, #tpu.memory_space<vmem>>, %arg4: memref<32x64xf32, #tpu.memory_space<vmem>>, %arg5: memref<9x64xf32, #tpu.memory_space<vmem>>, %arg6: memref<6x64xf32, #tpu.memory_space<vmem>>, %arg7: memref<1x64xf32, #tpu.memory_space<vmem>>, %arg8: memref<64x64xf32, #tpu.memory_space<vmem>>, %arg9: memref<1x64xf32, #tpu.memory_space<vmem>>, %arg10: memref<1x64xf32, #tpu.memory_space<vmem>>, %arg11: memref<1x1xf32, #tpu.memory_space<vmem>>, %arg12: memref<16x1xf32, #tpu.memory_space<vmem>>) attributes {dimension_semantics = [#tpu.dimension_semantics<parallel>], iteration_bounds = array<i64: 1>, scalar_prefetch = 0 : i64, scratch_operands = 0 : i64, tpu.core_type = #tpu.core_type<tc>, window_params = [{transform_indices = @transform_0, window_bounds = array<i64: 16, 32>}, {transform_indices = @transform_1, window_bounds = array<i64: 16, 9>}, {transform_indices = @transform_2, window_bounds = array<i64: 16, 6>}, {pipeline_mode = #tpu.pipeline_mode<synchronous>, transform_indices = @transform_3, window_bounds = array<i64: 32, 64>}, {pipeline_mode = #tpu.pipeline_mode<synchronous>, transform_indices = @transform_4, window_bounds = array<i64: 9, 64>}, {pipeline_mode = #tpu.pipeline_mode<synchronous>, transform_indices = @transform_5, window_bounds = array<i64: 6, 64>}, {pipeline_mode = #tpu.pipeline_mode<synchronous>, transform_indices = @transform_6, window_bounds = array<i64: 1, 64>}, {pipeline_mode = #tpu.pipeline_mode<synchronous>, transform_indices = @transform_7, window_bounds = array<i64: 64, 64>}, {pipeline_mode = #tpu.pipeline_mode<synchronous>, transform_indices = @transform_8, window_bounds = array<i64: 1, 64>}, {pipeline_mode = #tpu.pipeline_mode<synchronous>, transform_indices = @transform_9, window_bounds = array<i64: 1, 64>}, {pipeline_mode = #tpu.pipeline_mode<synchronous>, transform_indices = @transform_10, window_bounds = array<i64: 1, 1>}, {transform_indices = @transform_11, window_bounds = array<i64: 16, 1>}]} {
    %c0 = arith.constant 0 : index
    %c0_0 = arith.constant 0 : index
    %0 = vector.load %arg1[%c0, %c0_0] : memref<16x32xf32, #tpu.memory_space<vmem>>, vector<16x32xf32>
    %1 = arith.truncf %0 : vector<16x32xf32> to vector<16x32xbf16>
    %c0_1 = arith.constant 0 : index
    %c0_2 = arith.constant 0 : index
    %2 = vector.load %arg4[%c0_1, %c0_2] : memref<32x64xf32, #tpu.memory_space<vmem>>, vector<32x64xf32>
    %3 = arith.truncf %2 : vector<32x64xf32> to vector<32x64xbf16>
    %cst = arith.constant dense<0.000000e+00> : vector<16x64xf32>
    %4 = tpu.matmul %1, %3, %cst {dimension_numbers = #tpu.dot_dimension_numbers<[1], [0], [0], [1], [0, 0, 1, 1], [], []>} : vector<16x32xbf16>, vector<32x64xbf16>, vector<16x64xf32> -> vector<16x64xf32>
    %c0_3 = arith.constant 0 : index
    %c0_4 = arith.constant 0 : index
    %5 = vector.load %arg2[%c0_3, %c0_4] : memref<16x9xf32, #tpu.memory_space<vmem>>, vector<16x9xf32>
    %6 = arith.truncf %5 : vector<16x9xf32> to vector<16x9xbf16>
    %c0_5 = arith.constant 0 : index
    %c0_6 = arith.constant 0 : index
    %7 = vector.load %arg5[%c0_5, %c0_6] : memref<9x64xf32, #tpu.memory_space<vmem>>, vector<9x64xf32>
    %8 = arith.truncf %7 : vector<9x64xf32> to vector<9x64xbf16>
    %cst_7 = arith.constant dense<0.000000e+00> : vector<16x64xf32>
    %9 = tpu.matmul %6, %8, %cst_7 {dimension_numbers = #tpu.dot_dimension_numbers<[1], [0], [0], [1], [0, 0, 1, 1], [], []>} : vector<16x9xbf16>, vector<9x64xbf16>, vector<16x64xf32> -> vector<16x64xf32>
    %10 = arith.addf %4, %9 : vector<16x64xf32>
    %c0_8 = arith.constant 0 : index
    %c0_9 = arith.constant 0 : index
    %11 = vector.load %arg3[%c0_8, %c0_9] : memref<16x6xf32, #tpu.memory_space<vmem>>, vector<16x6xf32>
    %12 = arith.truncf %11 : vector<16x6xf32> to vector<16x6xbf16>
    %c0_10 = arith.constant 0 : index
    %c0_11 = arith.constant 0 : index
    %13 = vector.load %arg6[%c0_10, %c0_11] : memref<6x64xf32, #tpu.memory_space<vmem>>, vector<6x64xf32>
    %14 = arith.truncf %13 : vector<6x64xf32> to vector<6x64xbf16>
    %cst_12 = arith.constant dense<0.000000e+00> : vector<16x64xf32>
    %15 = tpu.matmul %12, %14, %cst_12 {dimension_numbers = #tpu.dot_dimension_numbers<[1], [0], [0], [1], [0, 0, 1, 1], [], []>} : vector<16x6xbf16>, vector<6x64xbf16>, vector<16x64xf32> -> vector<16x64xf32>
    %16 = arith.addf %10, %15 : vector<16x64xf32>
    %c0_13 = arith.constant 0 : index
    %c0_14 = arith.constant 0 : index
    %17 = vector.load %arg7[%c0_13, %c0_14] : memref<1x64xf32, #tpu.memory_space<vmem>>, vector<1x64xf32>
    %18 = vector.broadcast %17 : vector<1x64xf32> to vector<16x64xf32>
    %19 = arith.addf %16, %18 : vector<16x64xf32>
    %cst_15 = arith.constant 0.000000e+00 : f32
    %20 = vector.broadcast %cst_15 : f32 to vector<16x64xf32>
    %21 = arith.maximumf %19, %20 : vector<16x64xf32>
    %22 = arith.truncf %21 : vector<16x64xf32> to vector<16x64xbf16>
    %c0_16 = arith.constant 0 : index
    %c0_17 = arith.constant 0 : index
    %23 = vector.load %arg8[%c0_16, %c0_17] : memref<64x64xf32, #tpu.memory_space<vmem>>, vector<64x64xf32>
    %24 = arith.truncf %23 : vector<64x64xf32> to vector<64x64xbf16>
    %cst_18 = arith.constant dense<0.000000e+00> : vector<16x64xf32>
    %25 = tpu.matmul %22, %24, %cst_18 {dimension_numbers = #tpu.dot_dimension_numbers<[1], [0], [0], [1], [0, 0, 1, 1], [], []>} : vector<16x64xbf16>, vector<64x64xbf16>, vector<16x64xf32> -> vector<16x64xf32>
    %c0_19 = arith.constant 0 : index
    %c0_20 = arith.constant 0 : index
    %26 = vector.load %arg9[%c0_19, %c0_20] : memref<1x64xf32, #tpu.memory_space<vmem>>, vector<1x64xf32>
    %27 = vector.broadcast %26 : vector<1x64xf32> to vector<16x64xf32>
    %28 = arith.addf %25, %27 : vector<16x64xf32>
    %cst_21 = arith.constant 0.000000e+00 : f32
    %29 = vector.broadcast %cst_21 : f32 to vector<16x64xf32>
    %30 = arith.maximumf %28, %29 : vector<16x64xf32>
    %c0_22 = arith.constant 0 : index
    %c0_23 = arith.constant 0 : index
    %31 = vector.load %arg10[%c0_22, %c0_23] : memref<1x64xf32, #tpu.memory_space<vmem>>, vector<1x64xf32>
    %32 = vector.broadcast %31 : vector<1x64xf32> to vector<16x64xf32>
    %33 = arith.mulf %30, %32 : vector<16x64xf32>
    %cst_24 = arith.constant dense<0.000000e+00> : vector<16xf32>
    %34 = vector.multi_reduction <add>, %33, %cst_24 [1] : vector<16x64xf32> to vector<16xf32>
    %35 = vector.shape_cast %34 : vector<16xf32> to vector<16x1xf32>
    %c0_25 = arith.constant 0 : index
    %c0_26 = arith.constant 0 : index
    %36 = vector.load %arg11[%c0_25, %c0_26] : memref<1x1xf32, #tpu.memory_space<vmem>>, vector<1x1xf32>
    %37 = vector.broadcast %36 : vector<1x1xf32> to vector<16x1xf32>
    %38 = arith.addf %35, %37 : vector<16x1xf32>
    %c0_27 = arith.constant 0 : index
    %c0_28 = arith.constant 0 : index
    %39 = vector.load %arg12[%c0_27, %c0_28] : memref<16x1xf32, #tpu.memory_space<vmem>>, vector<16x1xf32>
    tpu.vector_store %arg12[%c0_27, %c0_28], %38 {strides = array<i32>} : memref<16x1xf32, #tpu.memory_space<vmem>>, vector<16x1xf32>,
    return
  }
  func.func @transform_0(%arg0: i32) -> (i32, i32) {
    %c0_i32 = arith.constant 0 : i32
    %c0_i32_0 = arith.constant 0 : i32
    return %arg0, %c0_i32 : i32, i32
  }
  func.func @transform_1(%arg0: i32) -> (i32, i32) {
    %c0_i32 = arith.constant 0 : i32
    %c0_i32_0 = arith.constant 0 : i32
    return %arg0, %c0_i32 : i32, i32
  }
  func.func @transform_2(%arg0: i32) -> (i32, i32) {
    %c0_i32 = arith.constant 0 : i32
    %c0_i32_0 = arith.constant 0 : i32
    return %arg0, %c0_i32 : i32, i32
  }
  func.func @transform_3(%arg0: i32) -> (i32, i32) {
    %c0_i32 = arith.constant 0 : i32
    %c0_i32_0 = arith.constant 0 : i32
    %c0_i32_1 = arith.constant 0 : i32
    return %c0_i32, %c0_i32_0 : i32, i32
  }
  func.func @transform_4(%arg0: i32) -> (i32, i32) {
    %c0_i32 = arith.constant 0 : i32
    %c0_i32_0 = arith.constant 0 : i32
    %c0_i32_1 = arith.constant 0 : i32
    return %c0_i32, %c0_i32_0 : i32, i32
  }
  func.func @transform_5(%arg0: i32) -> (i32, i32) {
    %c0_i32 = arith.constant 0 : i32
    %c0_i32_0 = arith.constant 0 : i32
    %c0_i32_1 = arith.constant 0 : i32
    return %c0_i32, %c0_i32_0 : i32, i32
  }
  func.func @transform_6(%arg0: i32) -> (i32, i32) {
    %c0_i32 = arith.constant 0 : i32
    %c0_i32_0 = arith.constant 0 : i32
    %c0_i32_1 = arith.constant 0 : i32
    return %c0_i32, %c0_i32_0 : i32, i32
  }
  func.func @transform_7(%arg0: i32) -> (i32, i32) {
    %c0_i32 = arith.constant 0 : i32
    %c0_i32_0 = arith.constant 0 : i32
    %c0_i32_1 = arith.constant 0 : i32
    return %c0_i32, %c0_i32_0 : i32, i32
  }
  func.func @transform_8(%arg0: i32) -> (i32, i32) {
    %c0_i32 = arith.constant 0 : i32
    %c0_i32_0 = arith.constant 0 : i32
    %c0_i32_1 = arith.constant 0 : i32
    return %c0_i32, %c0_i32_0 : i32, i32
  }
  func.func @transform_9(%arg0: i32) -> (i32, i32) {
    %c0_i32 = arith.constant 0 : i32
    %c0_i32_0 = arith.constant 0 : i32
    %c0_i32_1 = arith.constant 0 : i32
    return %c0_i32, %c0_i32_0 : i32, i32
  }
  func.func @transform_10(%arg0: i32) -> (i32, i32) {
    %c0_i32 = arith.constant 0 : i32
    %c0_i32_0 = arith.constant 0 : i32
    %c0_i32_1 = arith.constant 0 : i32
    return %c0_i32, %c0_i32_0 : i32, i32
  }
  func.func @transform_11(%arg0: i32) -> (i32, i32) {
    %c0_i32 = arith.constant 0 : i32
    %c0_i32_0 = arith.constant 0 : i32
    return %arg0, %c0_i32 : i32, i32
  }
}

</mosaic_0001>

<llo_original>
// kernel: qfunction_forward.1
$region0: #{qfunction_forward.1}
  #allocation0 [shape = 'u32[]', space=smem, size = 0x4, offset = 0x4, fixed_abs, tag = 'smem constant byte address 0x4 - core index']
  #allocation1 [shape = 'u32[144,128]{1,0:T(1,128)}', space=vmem, size = 0x12000, scoped, tag = 'internal scratch']
  #allocation2 [shape = 'f32[1,1]{1,0:T(1,128)S(1)}', space=vmem, size = 0x200, scoped, tag = 'scoped memory for qfunction_forward.1']
  %s0 = inlined_call_operand.vmem [shape: f32[16,32], index: 0, kind: input, shape index: {}]
  %s1 = inlined_call_operand.vmem [shape: f32[16,9], index: 1, kind: input, shape index: {}]
  %s2 = inlined_call_operand.vmem [shape: f32[16,6], index: 2, kind: input, shape index: {}]
  %s3 = inlined_call_operand.vmem [shape: f32[32,64], index: 3, kind: input, shape index: {}]
  %s4 = inlined_call_operand.vmem [shape: f32[9,64], index: 4, kind: input, shape index: {}]
  %s5 = inlined_call_operand.vmem [shape: f32[6,64], index: 5, kind: input, shape index: {}]
  %s6 = inlined_call_operand.vmem [shape: f32[1,64], index: 6, kind: input, shape index: {}]
  %s7 = inlined_call_operand.vmem [shape: f32[64,64], index: 7, kind: input, shape index: {}]
  %s8 = inlined_call_operand.vmem [shape: f32[1,64], index: 8, kind: input, shape index: {}]
  %s9 = inlined_call_operand.vmem [shape: f32[1,64], index: 9, kind: input, shape index: {}]
  %s10 = inlined_call_operand.<no memory space> [shape: f32[1,1], index: 10, kind: input, shape index: {}]
  %s11 = inlined_call_operand.vmem [shape: f32[16,1], index: 11, kind: output, shape index: {}]
  %s12 = sld [smem:[#allocation0]]
  $region54: #{qfunction_forward.1} parent=0
    _
  %s14 = ssub.s32 1, %s12
  %s15 = scalar_select 0, %s14, %s12
  %v16 = vstv %s10
  %17 = vst [vmem:[#allocation2] sm:$0x1] %v16
  // Predicated region
  $region2: #{qfunction_forward.1} parent=0 // pred_check
    _
  $region3: #{qfunction_forward.1} parent=0 // pred_check_branch
    %19 = sbr.rel (0) target = $region5
  $region4: #{qfunction_forward.1} parent=0 // pred_region
    _
  $region5: #{qfunction_forward.1} parent=0 // pred_fallthru
    _
  // Predicated region
  $region6: #{qfunction_forward.1} parent=0 // pred_check
    _
  $region7: #{qfunction_forward.1} parent=0 // pred_check_branch
    %21 = sbr.rel (0) target = $region9
  $region8: #{qfunction_forward.1} parent=0 // pred_region
    _
  $region9: #{qfunction_forward.1} parent=0 // pred_fallthru
    _
  // Predicated region
  $region10: #{qfunction_forward.1} parent=0 // pred_check
    _
  $region11: #{qfunction_forward.1} parent=0 // pred_check_branch
    %23 = sbr.rel (0) target = $region13
  $region12: #{qfunction_forward.1} parent=0 // pred_region
    _
  $region13: #{qfunction_forward.1} parent=0 // pred_fallthru
    _
  // Predicated region
  $region14: #{qfunction_forward.1} parent=0 // pred_check
    _
  $region15: #{qfunction_forward.1} parent=0 // pred_check_branch
    %25 = sbr.rel (0) target = $region17
  $region16: #{qfunction_forward.1} parent=0 // pred_region
    _
  $region17: #{qfunction_forward.1} parent=0 // pred_fallthru
    _
  // Predicated region
  $region18: #{qfunction_forward.1} parent=0 // pred_check
    _
  $region19: #{qfunction_forward.1} parent=0 // pred_check_branch
    %27 = sbr.rel (0) target = $region21
  $region20: #{qfunction_forward.1} parent=0 // pred_region
    _
  $region21: #{qfunction_forward.1} parent=0 // pred_fallthru
    _
  // Predicated region
  $region22: #{qfunction_forward.1} parent=0 // pred_check
    _
  $region23: #{qfunction_forward.1} parent=0 // pred_check_branch
    %29 = sbr.rel (0) target = $region25
  $region24: #{qfunction_forward.1} parent=0 // pred_region
    _
  $region25: #{qfunction_forward.1} parent=0 // pred_fallthru
    _
  // Predicated region
  $region26: #{qfunction_forward.1} parent=0 // pred_check
    _
  $region27: #{qfunction_forward.1} parent=0 // pred_check_branch
    %31 = sbr.rel (0) target = $region29
  $region28: #{qfunction_forward.1} parent=0 // pred_region
    _
  $region29: #{qfunction_forward.1} parent=0 // pred_fallthru
    _
  // Predicated region
  $region30: #{qfunction_forward.1} parent=0 // pred_check
    _
  $region31: #{qfunction_forward.1} parent=0 // pred_check_branch
    %33 = sbr.rel (0) target = $region33
  $region32: #{qfunction_forward.1} parent=0 // pred_region
    _
  $region33: #{qfunction_forward.1} parent=0 // pred_fallthru
    _
  // Predicated region
  $region34: #{qfunction_forward.1} parent=0 // pred_check
    _
  $region35: #{qfunction_forward.1} parent=0 // pred_check_branch
    %35 = sbr.rel (0) target = $region37
  $region36: #{qfunction_forward.1} parent=0 // pred_region
    _
  $region37: #{qfunction_forward.1} parent=0 // pred_fallthru
    _
  // Predicated region
  $region38: #{qfunction_forward.1} parent=0 // pred_check
    _
  $region39: #{qfunction_forward.1} parent=0 // pred_check_branch
    %37 = sbr.rel (0) target = $region41
  $region40: #{qfunction_forward.1} parent=0 // pred_region
    _
  $region41: #{qfunction_forward.1} parent=0 // pred_fallthru
    _
  // Predicated region
  $region42: #{qfunction_forward.1} parent=0 // pred_check
    _
  $region43: #{qfunction_forward.1} parent=0 // pred_check_branch
    %39 = sbr.rel (0) target = $region45
  $region44: #{qfunction_forward.1} parent=0 // pred_region
    _
  $region45: #{qfunction_forward.1} parent=0 // pred_fallthru
    _
  %v41 = vld [vmem:[%s0] sm:$0xff]
  %v42 = vld [vmem:[%s0 + $0x8] sm:$0xff]
  %v43 = vpack.c.bf16 %v42, %v41
  %v44 = vld [vmem:[%s3] sm:$0xff]
  %v45 = vld [vmem:[%s3 + $0x8] sm:$0xff]
  %v46 = vld [vmem:[%s3 + $0x10] sm:$0xff]
  %v47 = vld [vmem:[%s3 + $0x18] sm:$0xff]
  %v48 = vpack.c.bf16 %v45, %v44
  %v49 = vpack.c.bf16 %v47, %v46
  %v50 = vld [vmem:[%s1] sm:$0xff]
  %v51 = vld [vmem:[%s1 + $0x8] sm:$0xff]
  %v52 = vpack.c.bf16 %v51, %v50
  %v53 = vld [vmem:[%s4] sm:$0xff]
  %v54 = vld [vmem:[%s4 + $0x8] sm:$0x1]
  %v55 = vpack.c.bf16 %v54, %v53
  %vm56 = vcmask 72704
  %v58 = vsel %vm56, %v52, 0
  %vm60 = vcmask 1043456
  %vm61 = vcmask 1044480
  %v62 = vsel %vm60, 4294967295, 65535
  %v63 = vsel %vm61, %v62, 0
  %v65 = vand.u32 %v55, %v63
  %67 = vmatprep.subr.bf16.mxu0 0
  %68 = vmatpush1.bf16.msra.mxu0 %v65
  %69 = vmatprep.subr.bf16.mxu0 0
  %70 = vmatpush1.bf16.msra.mxu0 0
  %71 = vmatprep.subr.bf16.mxu0 0
  %72 = vmatpush1.bf16.msra.mxu0 0
  %73 = vmatprep.subr.bf16.mxu0 0
  %74 = vmatpush1.bf16.msra.mxu0 0
  %75 = vmatprep.subr.bf16.mxu0 0
  %76 = vmatpush1.bf16.msra.mxu0 0
  %77 = vmatprep.subr.bf16.mxu0 0
  %78 = vmatpush1.bf16.msra.mxu0 0
  %79 = vmatprep.subr.bf16.mxu0 0
  %80 = vmatpush1.bf16.msra.mxu0 0
  %81 = vmatprep.subr.bf16.mxu0 0
  %82 = vmatpush1.bf16.msra.mxu0 0
  %83 = vmatprep.subr.bf16.mxu0 0
  %84 = vmatpush1.bf16.msra.mxu0 0
  %85 = vmatprep.subr.bf16.mxu0 0
  %86 = vmatpush1.bf16.msra.mxu0 0
  %87 = vmatprep.subr.bf16.mxu0 0
  %88 = vmatpush1.bf16.msra.mxu0 0
  %89 = vmatprep.subr.bf16.mxu0 0
  %90 = vmatpush1.bf16.msra.mxu0 0
  %91 = vmatprep.subr.bf16.mxu0 0
  %92 = vmatpush1.bf16.msra.mxu0 0
  %93 = vmatprep.subr.bf16.mxu0 0
  %94 = vmatpush1.bf16.msra.mxu0 0
  %95 = vmatprep.subr.bf16.mxu0 0
  %96 = vmatpush1.bf16.msra.mxu0 0
  %97 = vmatprep.subr.bf16.mxu0 0
  %98 = vmatpush1.bf16.msra.mxu0 0
  %99 = vmatprep.mubr.bf16.mxu0 0
  %100 = vmatmul.mubr.bf16.gmra.mrb[0].mxu0 %v58
  %v101 = vpop.f32.mrb[0].mxu0
  %v102 = vadd.f32 0.0, %v101
  %v103 = vpop.f32.mrb[0].mxu0
  %v104 = vpop.f32.mrb[0].mxu0
  %v105 = vadd.f32 0.0, %v104
  %v106 = vpop.f32.mrb[0].mxu0
  %107 = vdwg.mxu0
  %vm108 = vcmask 261120
  %v110 = vsel %vm108, %v43, 0
  %112 = vmatprep.subr.bf16.mxu0 0
  %113 = vmatpush1.bf16.msra.mxu0 %v48
  %114 = vmatprep.subr.bf16.mxu0 0
  %115 = vmatpush1.bf16.msra.mxu0 %v49
  %116 = vmatprep.subr.bf16.mxu0 0
  %117 = vmatpush1.bf16.msra.mxu0 0
  %118 = vmatprep.subr.bf16.mxu0 0
  %119 = vmatpush1.bf16.msra.mxu0 0
  %120 = vmatprep.subr.bf16.mxu0 0
  %121 = vmatpush1.bf16.msra.mxu0 0
  %122 = vmatprep.subr.bf16.mxu0 0
  %123 = vmatpush1.bf16.msra.mxu0 0
  %124 = vmatprep.subr.bf16.mxu0 0
  %125 = vmatpush1.bf16.msra.mxu0 0
  %126 = vmatprep.subr.bf16.mxu0 0
  %127 = vmatpush1.bf16.msra.mxu0 0
  %128 = vmatprep.subr.bf16.mxu0 0
  %129 = vmatpush1.bf16.msra.mxu0 0
  %130 = vmatprep.subr.bf16.mxu0 0
  %131 = vmatpush1.bf16.msra.mxu0 0
  %132 = vmatprep.subr.bf16.mxu0 0
  %133 = vmatpush1.bf16.msra.mxu0 0
  %134 = vmatprep.subr.bf16.mxu0 0
  %135 = vmatpush1.bf16.msra.mxu0 0
  %136 = vmatprep.subr.bf16.mxu0 0
  %137 = vmatpush1.bf16.msra.mxu0 0
  %138 = vmatprep.subr.bf16.mxu0 0
  %139 = vmatpush1.bf16.msra.mxu0 0
  %140 = vmatprep.subr.bf16.mxu0 0
  %141 = vmatpush1.bf16.msra.mxu0 0
  %142 = vmatprep.subr.bf16.mxu0 0
  %143 = vmatpush1.bf16.msra.mxu0 0
  %144 = vmatprep.mubr.bf16.mxu0 0
  %145 = vmatmul.mubr.bf16.gmra.mrb[0].mxu0 %v110
  %v146 = vpop.f32.mrb[0].mxu0
  %v147 = vadd.f32 %v102, %v146
  %v148 = vpop.f32.mrb[0].mxu0
  %v149 = vpop.f32.mrb[0].mxu0
  %v150 = vadd.f32 %v105, %v149
  %v151 = vpop.f32.mrb[0].mxu0
  %152 = vdwg.mxu0
  %v153 = vld [vmem:[%s2] sm:$0xff]
  %v154 = vld [vmem:[%s2 + $0x8] sm:$0xff]
  %v155 = vpack.c.bf16 %v154, %v153
  %v156 = vld [vmem:[%s5] sm:$0x3f]
  %v157 = vpack.c.bf16 %v156, %v156
  %vm158 = vcmask 48128
  %v160 = vsel %vm158, %v155, 0
  %vm162 = vcmask 1042432
  %v164 = vsel %vm162, %v157, 0
  %166 = vmatprep.subr.bf16.mxu0 0
  %167 = vmatpush1.bf16.msra.mxu0 %v164
  %168 = vmatprep.subr.bf16.mxu0 0
  %169 = vmatpush1.bf16.msra.mxu0 0
  %170 = vmatprep.subr.bf16.mxu0 0
  %171 = vmatpush1.bf16.msra.mxu0 0
  %172 = vmatprep.subr.bf16.mxu0 0
  %173 = vmatpush1.bf16.msra.mxu0 0
  %174 = vmatprep.subr.bf16.mxu0 0
  %175 = vmatpush1.bf16.msra.mxu0 0
  %176 = vmatprep.subr.bf16.mxu0 0
  %177 = vmatpush1.bf16.msra.mxu0 0
  %178 = vmatprep.subr.bf16.mxu0 0
  %179 = vmatpush1.bf16.msra.mxu0 0
  %180 = vmatprep.subr.bf16.mxu0 0
  %181 = vmatpush1.bf16.msra.mxu0 0
  %182 = vmatprep.subr.bf16.mxu0 0
  %183 = vmatpush1.bf16.msra.mxu0 0
  %184 = vmatprep.subr.bf16.mxu0 0
  %185 = vmatpush1.bf16.msra.mxu0 0
  %186 = vmatprep.subr.bf16.mxu0 0
  %187 = vmatpush1.bf16.msra.mxu0 0
  %188 = vmatprep.subr.bf16.mxu0 0
  %189 = vmatpush1.bf16.msra.mxu0 0
  %190 = vmatprep.subr.bf16.mxu0 0
  %191 = vmatpush1.bf16.msra.mxu0 0
  %192 = vmatprep.subr.bf16.mxu0 0
  %193 = vmatpush1.bf16.msra.mxu0 0
  %194 = vmatprep.subr.bf16.mxu0 0
  %195 = vmatpush1.bf16.msra.mxu0 0
  %196 = vmatprep.subr.bf16.mxu0 0
  %197 = vmatpush1.bf16.msra.mxu0 0
  %198 = vmatprep.mubr.bf16.mxu0 0
  %199 = vmatmul.mubr.bf16.gmra.mrb[0].mxu0 %v160
  %v200 = vpop.f32.mrb[0].mxu0
  %v201 = vadd.f32 0.0, %v200
  %v202 = vpop.f32.mrb[0].mxu0
  %v203 = vpop.f32.mrb[0].mxu0
  %v204 = vadd.f32 0.0, %v203
  %v205 = vpop.f32.mrb[0].mxu0
  %206 = vdwg.mxu0
  %v207 = vadd.f32 %v147, %v201
  %v208 = vadd.f32 %v150, %v204
  %v209 = vld [vmem:[%s6] sm:$0x1]
  %v211 = vlaneseq
  %v212 = vshrl.u32 %v211, 7
  %v213 = vsub.s32 0, %v212
  %v214 = vrot.slane %v209, %v213
  %v216 = vadd.f32 %v207, %v214
  %v217 = vadd.f32 %v208, %v214
  %v218 = vmax.f32 %v216, 0.0
  %v219 = vmax.f32 %v217, 0.0
  %v220 = vpack.c.bf16 %v219, %v218
  %v221 = vld [vmem:[%s7] sm:$0xff]
  %v222 = vld [vmem:[%s7 + $0x8] sm:$0xff]
  %v223 = vld [vmem:[%s7 + $0x10] sm:$0xff]
  %v224 = vld [vmem:[%s7 + $0x18] sm:$0xff]
  %v225 = vld [vmem:[%s7 + $0x20] sm:$0xff]
  %v226 = vld [vmem:[%s7 + $0x28] sm:$0xff]
  %v227 = vld [vmem:[%s7 + $0x30] sm:$0xff]
  %v228 = vld [vmem:[%s7 + $0x38] sm:$0xff]
  %v229 = vpack.c.bf16 %v222, %v221
  %v230 = vpack.c.bf16 %v224, %v223
  %v231 = vpack.c.bf16 %v226, %v225
  %v232 = vpack.c.bf16 %v228, %v227
  %v233 = vld [vmem:[%s8] sm:$0x1]
  %v235 = vlaneseq
  %v236 = vshrl.u32 %v235, 7
  %v237 = vsub.s32 0, %v236
  %v238 = vrot.slane %v233, %v237
  %vm240 = vcmask 523264
  %v242 = vsel %vm240, %v220, 0
  %244 = vmatprep.subr.bf16.mxu0 0
  %245 = vmatpush1.bf16.msra.mxu0 %v229
  %246 = vmatprep.subr.bf16.mxu0 0
  %247 = vmatpush1.bf16.msra.mxu0 %v230
  %248 = vmatprep.subr.bf16.mxu0 0
  %249 = vmatpush1.bf16.msra.mxu0 %v231
  %250 = vmatprep.subr.bf16.mxu0 0
  %251 = vmatpush1.bf16.msra.mxu0 %v232
  %252 = vmatprep.subr.bf16.mxu0 0
  %253 = vmatpush1.bf16.msra.mxu0 0
  %254 = vmatprep.subr.bf16.mxu0 0
  %255 = vmatpush1.bf16.msra.mxu0 0
  %256 = vmatprep.subr.bf16.mxu0 0
  %257 = vmatpush1.bf16.msra.mxu0 0
  %258 = vmatprep.subr.bf16.mxu0 0
  %259 = vmatpush1.bf16.msra.mxu0 0
  %260 = vmatprep.subr.bf16.mxu0 0
  %261 = vmatpush1.bf16.msra.mxu0 0
  %262 = vmatprep.subr.bf16.mxu0 0
  %263 = vmatpush1.bf16.msra.mxu0 0
  %264 = vmatprep.subr.bf16.mxu0 0
  %265 = vmatpush1.bf16.msra.mxu0 0
  %266 = vmatprep.subr.bf16.mxu0 0
  %267 = vmatpush1.bf16.msra.mxu0 0
  %268 = vmatprep.subr.bf16.mxu0 0
  %269 = vmatpush1.bf16.msra.mxu0 0
  %270 = vmatprep.subr.bf16.mxu0 0
  %271 = vmatpush1.bf16.msra.mxu0 0
  %272 = vmatprep.subr.bf16.mxu0 0
  %273 = vmatpush1.bf16.msra.mxu0 0
  %274 = vmatprep.subr.bf16.mxu0 0
  %275 = vmatpush1.bf16.msra.mxu0 0
  %276 = vmatprep.mubr.bf16.mxu0 0
  %277 = vmatmul.mubr.bf16.gmra.mrb[0].mxu0 %v242
  %v278 = vpop.f32.mrb[0].mxu0
  %v279 = vadd.f32 %v238, %v278
  %v280 = vpop.f32.mrb[0].mxu0
  %v281 = vpop.f32.mrb[0].mxu0
  %v282 = vadd.f32 %v238, %v281
  %v283 = vpop.f32.mrb[0].mxu0
  %284 = vdwg.mxu0
  %v285 = vmax.f32 %v279, 0.0
  %v286 = vmax.f32 %v282, 0.0
  %v287 = vld [vmem:[%s9] sm:$0x1]
  %v289 = vlaneseq
  %v290 = vshrl.u32 %v289, 7
  %v291 = vsub.s32 0, %v290
  %v292 = vrot.slane %v287, %v291
  %v294 = vmul.f32 %v285, %v292
  %v295 = vmul.f32 %v286, %v292
  %v296 = vsel %vm240, %v294, 0.0
  %297 = vadd.xlane.f32.xlu0 %v296
  %v298 = vpop.xlane.xlu0 %297
  %v299 = vsel %vm240, %v295, 0.0
  %300 = vadd.xlane.f32.xlu0 %v299
  %v301 = vpop.xlane.xlu0 %300
  %v302 = vld [vmem:[#allocation2] sm:$0x1]
  %v304 = vlaneseq
  %v305 = vshrl.u32 %v304, 7
  %v306 = vsub.s32 0, %v305
  %v307 = vrot.slane %v302, %v306
  %v309 = vadd.f32 %v298, %v307
  %v310 = vadd.f32 %v301, %v307
  %vm311 = vcmask 7168
  %312 = vst.msk [vmem:[%s11] sm:$0xff] %vm311, %v309
  %313 = vst.msk [vmem:[%s11 + $0x8] sm:$0xff] %vm311, %v310
  // Predicated region
  $region46: #{qfunction_forward.1} parent=0 // pred_check
    _
  $region47: #{qfunction_forward.1} parent=0 // pred_check_branch
    %315 = sbr.rel (0) target = $region49
  $region48: #{qfunction_forward.1} parent=0 // pred_region
    _
  $region49: #{qfunction_forward.1} parent=0 // pred_fallthru
    _
  // Predicated region
  $region50: #{qfunction_forward.1} parent=0 // pred_check
    _
  $region51: #{qfunction_forward.1} parent=0 // pred_check_branch
    %317 = sbr.rel (0) target = $region53
  $region52: #{qfunction_forward.1} parent=0 // pred_region
    _
  $region53: #{qfunction_forward.1} parent=0 // pred_fallthru
    _

</llo_original>
